<compile_context>
chip_gen: v7x
topology: tpu7x:2x2x1
jax: 0.10.0
libtpu: 0.0.40
codegen_flags: <defaults>
</compile_context>

<pallas_src>
import jax
import jax.numpy as jnp
from jax.experimental import pallas as pl
from jax.experimental.pallas import tpu as pltpu


def squat_mlp_kernel(x_ref, w1_ref, b1_ref, w2_ref, b2_ref, w3_ref, b3_ref,
                     o_ref):
    x = x_ref[...]                                                   # (TB, D)

    # ---- Linear 1 (eval-mode BN folded) + ReLU;  Dropout(eval) = identity ----
    h1 = jnp.dot(x, w1_ref[...], preferred_element_type=jnp.float32) + b1_ref[...]
    h1 = jnp.maximum(h1, 0.0).astype(w2_ref.dtype)

    # ---- Linear 2 (eval-mode BN folded) + ReLU ----
    h2 = jnp.dot(h1, w2_ref[...], preferred_element_type=jnp.float32) + b2_ref[...]
    h2 = jnp.maximum(h2, 0.0).astype(w3_ref.dtype)

    # ---- Output Linear (out_dim = 2; narrow masked store is fine here) ----
    o_ref[...] = (jnp.dot(h2, w3_ref[...], preferred_element_type=jnp.float32)
                  + b3_ref[...]).astype(o_ref.dtype)


def squat_mlp_forward(x, params, *, tile_rows=8192, use_bf16=False,
                      vmem_budget_bytes=32 * 1024 * 1024):
    """Eval-mode forward.  x: (B, input_dim)."""
    (w1, b1, s1, t1, w2, b2, s2, t2, w3, b3) = params

    # Fold eval-mode BatchNorm (per-feature scale s, shift t) into the linears:
    #   (x @ w + b) * s + t == x @ (w * s) + (b * s + t)
    w1f = (w1 * s1).astype(jnp.float32)
    b1f = (b1 * s1 + t1).astype(jnp.float32)
    w2f = (w2 * s2).astype(jnp.float32)
    b2f = (b2 * s2 + t2).astype(jnp.float32)
    w3f = w3.astype(jnp.float32)
    b3f = b3.astype(jnp.float32)

    compute_dtype = jnp.bfloat16 if use_bf16 else jnp.float32
    x = x.astype(compute_dtype)
    w1f = w1f.astype(compute_dtype)
    w2f = w2f.astype(compute_dtype)
    w3f = w3f.astype(compute_dtype)

    B, D = x.shape
    H1 = w1f.shape[1]
    H2 = w2f.shape[1]
    out_dim = w3f.shape[1]

    # --- Tile sizing: VMEM footprint per tile row uses LANE-PADDED widths ---
    # (last dim pads to 128 lanes in VMEM regardless of logical width).
    lane = 128
    itemsize = jnp.dtype(compute_dtype).itemsize
    pad = lambda n: ((n + lane - 1) // lane) * lane
    bytes_per_row = (2 * pad(D) * itemsize        # double-buffered x tile
                     + 2 * pad(out_dim) * 4       # double-buffered out tile (f32)
                     + pad(H1) * 4 + pad(H2) * 4) # h1 / h2 intermediates (f32)
    max_tb = max(8, (vmem_budget_bytes // max(bytes_per_row, 1)) // 8 * 8)

    TB = min(int(tile_rows), max_tb, ((B + 7) // 8) * 8)
    TB = max(8, (TB // 8) * 8)

    grid = (pl.cdiv(B, TB),)   # trailing partial block handled by Pallas masking

    def const_spec(shape):
        # Weights/biases: resident in VMEM, same block every grid step.
        return pl.BlockSpec(shape, lambda i: (0, 0))

    flops = 2 * B * (D * H1 + H1 * H2 + H2 * out_dim)
    bytes_accessed = (B * D * itemsize + B * out_dim * 4
                      + (w1f.size + w2f.size + w3f.size) * itemsize
                      + (b1f.size + b2f.size + b3f.size) * 4)

    out = pl.pallas_call(
        squat_mlp_kernel,
        out_shape=jax.ShapeDtypeStruct((B, out_dim), jnp.float32),
        grid=grid,
        in_specs=[
            pl.BlockSpec((TB, D), lambda i: (i, 0)),      # x streams by batch tile
            const_spec(w1f.shape), const_spec(b1f.shape),
            const_spec(w2f.shape), const_spec(b2f.shape),
            const_spec(w3f.shape), const_spec(b3f.shape),
        ],
        out_specs=pl.BlockSpec((TB, out_dim), lambda i: (i, 0)),
        compiler_params=pltpu.CompilerParams(
            dimension_semantics=("parallel",),
            vmem_limit_bytes=48 * 1024 * 1024),
        cost_estimate=pl.CostEstimate(flops=flops, transcendentals=0,
                                      bytes_accessed=bytes_accessed),
    )(x, w1f, b1f, w2f, b2f, w3f, b3f)

    return out


def init_params(key, input_dim, hidden_dims=(32, 16), out_dim=2, eps=1e-5):
    """Deterministic parameter init mirroring the PyTorch __init__.

    Weights: xavier normal (std = sqrt(2/(fan_in+fan_out))); bias = 0.1.
    BatchNorm: gamma=1, beta=0, running_mean=0, running_var=1 (fresh module),
    expressed as per-feature (scale, shift) which the wrapper folds in.
    """
    dims = [input_dim] + list(hidden_dims)
    keys = jax.random.split(key, len(dims))  # one per layer incl. output

    params = []
    for i, (din, dout) in enumerate(zip(dims[:-1], dims[1:])):
        std = (2.0 / (din + dout)) ** 0.5
        w = std * jax.random.normal(keys[i], (din, dout), dtype=jnp.float32)
        b = jnp.full((1, dout), 0.1, dtype=jnp.float32)
        # Folded eval-mode BN: scale = gamma/sqrt(var+eps), shift = beta - mean*scale
        scale = jnp.full((1, dout), 1.0 / (1.0 + eps) ** 0.5, dtype=jnp.float32)
        shift = jnp.zeros((1, dout), dtype=jnp.float32)
        params.extend([w, b, scale, shift])

    din, dout = dims[-1], out_dim
    std = (2.0 / (din + dout)) ** 0.5
    w_out = std * jax.random.normal(keys[-1], (din, dout), dtype=jnp.float32)
    b_out = jnp.full((1, dout), 0.1, dtype=jnp.float32)
    params.extend([w_out, b_out])
    return tuple(params)


def reference_forward(x, params):
    """Pure-JAX reference (BN kept un-folded) for a sanity check."""
    (w1, b1, s1, t1, w2, b2, s2, t2, w3, b3) = params
    h1 = jnp.maximum((x @ w1 + b1) * s1 + t1, 0.0)
    h2 = jnp.maximum((h1 @ w2 + b2) * s2 + t2, 0.0)
    return h2 @ w3 + b3


if __name__ == "__main__":
    key = jax.random.PRNGKey(0)
    k_x, k_p = jax.random.split(key)

    B, input_dim = 8, 16
    x = jax.random.normal(k_x, (B, input_dim), dtype=jnp.float32)
    params = init_params(k_p, input_dim, hidden_dims=(32, 16), out_dim=2)

    out = jax.block_until_ready(squat_mlp_forward(x, params))
    ref = reference_forward(x, params)
    assert out.shape == (B, 2)
    assert jnp.allclose(out, ref, atol=1e-5, rtol=1e-5), "mismatch vs JAX reference"

    # Ragged / multi-tile batch: grid = cdiv(20, 8) = 3, trailing partial block
    # exercises Pallas' masked writes (no wrapper-side jnp.pad).
    B2 = 20
    x2 = jax.random.normal(jax.random.PRNGKey(1), (B2, input_dim), dtype=jnp.float32)
    out2 = jax.block_until_ready(squat_mlp_forward(x2, params, tile_rows=8))
    ref2 = reference_forward(x2, params)
    assert out2.shape == (B2, 2)
    assert jnp.allclose(out2, ref2, atol=1e-5, rtol=1e-5), "ragged-batch mismatch"

    # Optional bf16 input-stream path (looser tolerance).
    out3 = jax.block_until_ready(squat_mlp_forward(x2, params, use_bf16=True))
    assert out3.shape == (B2, 2)
    assert jnp.allclose(out3, ref2, atol=5e-2, rtol=5e-2), "bf16 path mismatch"

    print("KERNEL_OK")
</pallas_src>

<mosaic_0001>
module attributes {stable_mosaic.version = 11 : i64} {
  func.func @squat_mlp_kernel(%arg0: i32, %arg1: memref<8x16xf32, #tpu.memory_space<vmem>>, %arg2: memref<16x32xf32, #tpu.memory_space<vmem>>, %arg3: memref<1x32xf32, #tpu.memory_space<vmem>>, %arg4: memref<32x16xf32, #tpu.memory_space<vmem>>, %arg5: memref<1x16xf32, #tpu.memory_space<vmem>>, %arg6: memref<16x2xf32, #tpu.memory_space<vmem>>, %arg7: memref<1x2xf32, #tpu.memory_space<vmem>>, %arg8: memref<8x2xf32, #tpu.memory_space<vmem>>) attributes {dimension_semantics = [#tpu.dimension_semantics<parallel>], iteration_bounds = array<i64: 1>, scalar_prefetch = 0 : i64, scratch_operands = 0 : i64, tpu.core_type = #tpu.core_type<tc>, window_params = [{transform_indices = @transform_0, window_bounds = array<i64: 8, 16>}, {pipeline_mode = #tpu.pipeline_mode<synchronous>, transform_indices = @transform_1, window_bounds = array<i64: 16, 32>}, {pipeline_mode = #tpu.pipeline_mode<synchronous>, transform_indices = @transform_2, window_bounds = array<i64: 1, 32>}, {pipeline_mode = #tpu.pipeline_mode<synchronous>, transform_indices = @transform_3, window_bounds = array<i64: 32, 16>}, {pipeline_mode = #tpu.pipeline_mode<synchronous>, transform_indices = @transform_4, window_bounds = array<i64: 1, 16>}, {pipeline_mode = #tpu.pipeline_mode<synchronous>, transform_indices = @transform_5, window_bounds = array<i64: 16, 2>}, {pipeline_mode = #tpu.pipeline_mode<synchronous>, transform_indices = @transform_6, window_bounds = array<i64: 1, 2>}, {transform_indices = @transform_7, window_bounds = array<i64: 8, 2>}]} {
    %c0 = arith.constant 0 : index
    %c0_0 = arith.constant 0 : index
    %0 = vector.load %arg1[%c0, %c0_0] : memref<8x16xf32, #tpu.memory_space<vmem>>, vector<8x16xf32>
    %c0_1 = arith.constant 0 : index
    %c0_2 = arith.constant 0 : index
    %1 = vector.load %arg2[%c0_1, %c0_2] : memref<16x32xf32, #tpu.memory_space<vmem>>, vector<16x32xf32>
    %cst = arith.constant dense<0.000000e+00> : vector<8x32xf32>
    %2 = tpu.matmul %0, %1, %cst {dimension_numbers = #tpu.dot_dimension_numbers<[1], [0], [0], [1], [0, 0, 1, 1], [], []>} : vector<8x16xf32>, vector<16x32xf32>, vector<8x32xf32> -> vector<8x32xf32>
    %c0_3 = arith.constant 0 : index
    %c0_4 = arith.constant 0 : index
    %3 = vector.load %arg3[%c0_3, %c0_4] : memref<1x32xf32, #tpu.memory_space<vmem>>, vector<1x32xf32>
    %4 = vector.broadcast %3 : vector<1x32xf32> to vector<8x32xf32>
    %5 = arith.addf %2, %4 : vector<8x32xf32>
    %cst_5 = arith.constant 0.000000e+00 : f32
    %6 = vector.broadcast %cst_5 : f32 to vector<8x32xf32>
    %7 = arith.maximumf %5, %6 : vector<8x32xf32>
    %c0_6 = arith.constant 0 : index
    %c0_7 = arith.constant 0 : index
    %8 = vector.load %arg4[%c0_6, %c0_7] : memref<32x16xf32, #tpu.memory_space<vmem>>, vector<32x16xf32>
    %cst_8 = arith.constant dense<0.000000e+00> : vector<8x16xf32>
    %9 = tpu.matmul %7, %8, %cst_8 {dimension_numbers = #tpu.dot_dimension_numbers<[1], [0], [0], [1], [0, 0, 1, 1], [], []>} : vector<8x32xf32>, vector<32x16xf32>, vector<8x16xf32> -> vector<8x16xf32>
    %c0_9 = arith.constant 0 : index
    %c0_10 = arith.constant 0 : index
    %10 = vector.load %arg5[%c0_9, %c0_10] : memref<1x16xf32, #tpu.memory_space<vmem>>, vector<1x16xf32>
    %11 = vector.broadcast %10 : vector<1x16xf32> to vector<8x16xf32>
    %12 = arith.addf %9, %11 : vector<8x16xf32>
    %cst_11 = arith.constant 0.000000e+00 : f32
    %13 = vector.broadcast %cst_11 : f32 to vector<8x16xf32>
    %14 = arith.maximumf %12, %13 : vector<8x16xf32>
    %c0_12 = arith.constant 0 : index
    %c0_13 = arith.constant 0 : index
    %15 = vector.load %arg6[%c0_12, %c0_13] : memref<16x2xf32, #tpu.memory_space<vmem>>, vector<16x2xf32>
    %cst_14 = arith.constant dense<0.000000e+00> : vector<8x2xf32>
    %16 = tpu.matmul %14, %15, %cst_14 {dimension_numbers = #tpu.dot_dimension_numbers<[1], [0], [0], [1], [0, 0, 1, 1], [], []>} : vector<8x16xf32>, vector<16x2xf32>, vector<8x2xf32> -> vector<8x2xf32>
    %c0_15 = arith.constant 0 : index
    %c0_16 = arith.constant 0 : index
    %17 = vector.load %arg7[%c0_15, %c0_16] : memref<1x2xf32, #tpu.memory_space<vmem>>, vector<1x2xf32>
    %18 = vector.broadcast %17 : vector<1x2xf32> to vector<8x2xf32>
    %19 = arith.addf %16, %18 : vector<8x2xf32>
    %c0_17 = arith.constant 0 : index
    %c0_18 = arith.constant 0 : index
    %20 = vector.load %arg8[%c0_17, %c0_18] : memref<8x2xf32, #tpu.memory_space<vmem>>, vector<8x2xf32>
    tpu.vector_store %arg8[%c0_17, %c0_18], %19 {strides = array<i32>} : memref<8x2xf32, #tpu.memory_space<vmem>>, vector<8x2xf32>,
    return
  }
  func.func @transform_0(%arg0: i32) -> (i32, i32) {
    %c0_i32 = arith.constant 0 : i32
    %c0_i32_0 = arith.constant 0 : i32
    return %arg0, %c0_i32 : i32, i32
  }
  func.func @transform_1(%arg0: i32) -> (i32, i32) {
    %c0_i32 = arith.constant 0 : i32
    %c0_i32_0 = arith.constant 0 : i32
    %c0_i32_1 = arith.constant 0 : i32
    return %c0_i32, %c0_i32_0 : i32, i32
  }
  func.func @transform_2(%arg0: i32) -> (i32, i32) {
    %c0_i32 = arith.constant 0 : i32
    %c0_i32_0 = arith.constant 0 : i32
    %c0_i32_1 = arith.constant 0 : i32
    return %c0_i32, %c0_i32_0 : i32, i32
  }
  func.func @transform_3(%arg0: i32) -> (i32, i32) {
    %c0_i32 = arith.constant 0 : i32
    %c0_i32_0 = arith.constant 0 : i32
    %c0_i32_1 = arith.constant 0 : i32
    return %c0_i32, %c0_i32_0 : i32, i32
  }
  func.func @transform_4(%arg0: i32) -> (i32, i32) {
    %c0_i32 = arith.constant 0 : i32
    %c0_i32_0 = arith.constant 0 : i32
    %c0_i32_1 = arith.constant 0 : i32
    return %c0_i32, %c0_i32_0 : i32, i32
  }
  func.func @transform_5(%arg0: i32) -> (i32, i32) {
    %c0_i32 = arith.constant 0 : i32
    %c0_i32_0 = arith.constant 0 : i32
    %c0_i32_1 = arith.constant 0 : i32
    return %c0_i32, %c0_i32_0 : i32, i32
  }
  func.func @transform_6(%arg0: i32) -> (i32, i32) {
    %c0_i32 = arith.constant 0 : i32
    %c0_i32_0 = arith.constant 0 : i32
    %c0_i32_1 = arith.constant 0 : i32
    return %c0_i32, %c0_i32_0 : i32, i32
  }
  func.func @transform_7(%arg0: i32) -> (i32, i32) {
    %c0_i32 = arith.constant 0 : i32
    %c0_i32_0 = arith.constant 0 : i32
    return %arg0, %c0_i32 : i32, i32
  }
}

</mosaic_0001>

<llo_original>
// kernel: tpu_custom_call.1
$region0: #{tpu_custom_call.1}
  #allocation0 [shape = 'u32[]', space=smem, size = 0x4, offset = 0x4, fixed_abs, tag = 'smem constant byte address 0x4 - core index']
  #allocation1 [shape = 'u32[144,128]{1,0:T(1,128)}', space=vmem, size = 0x12000, scoped, tag = 'internal scratch']
  %s0 = inlined_call_operand.vmem [shape: f32[8,16], index: 0, kind: input, shape index: {}]
  %s1 = inlined_call_operand.vmem [shape: f32[16,32], index: 1, kind: input, shape index: {}]
  %s2 = inlined_call_operand.vmem [shape: f32[1,32], index: 2, kind: input, shape index: {}]
  %s3 = inlined_call_operand.vmem [shape: f32[32,16], index: 3, kind: input, shape index: {}]
  %s4 = inlined_call_operand.vmem [shape: f32[1,16], index: 4, kind: input, shape index: {}]
  %s5 = inlined_call_operand.vmem [shape: f32[16,2], index: 5, kind: input, shape index: {}]
  %s6 = inlined_call_operand.vmem [shape: f32[1,2], index: 6, kind: input, shape index: {}]
  %s7 = inlined_call_operand.vmem [shape: f32[8,2], index: 7, kind: output, shape index: {}]
  %s8 = sld [smem:[#allocation0]]
  $region38: #{tpu_custom_call.1} parent=0
    _
  %s10 = ssub.s32 1, %s8
  %s11 = scalar_select 0, %s10, %s8
  // Predicated region
  $region2: #{tpu_custom_call.1} parent=0 // pred_check
    _
  $region3: #{tpu_custom_call.1} parent=0 // pred_check_branch
    %13 = sbr.rel (0) target = $region5
  $region4: #{tpu_custom_call.1} parent=0 // pred_region
    _
  $region5: #{tpu_custom_call.1} parent=0 // pred_fallthru
    _
  // Predicated region
  $region6: #{tpu_custom_call.1} parent=0 // pred_check
    _
  $region7: #{tpu_custom_call.1} parent=0 // pred_check_branch
    %15 = sbr.rel (0) target = $region9
  $region8: #{tpu_custom_call.1} parent=0 // pred_region
    _
  $region9: #{tpu_custom_call.1} parent=0 // pred_fallthru
    _
  // Predicated region
  $region10: #{tpu_custom_call.1} parent=0 // pred_check
    _
  $region11: #{tpu_custom_call.1} parent=0 // pred_check_branch
    %17 = sbr.rel (0) target = $region13
  $region12: #{tpu_custom_call.1} parent=0 // pred_region
    _
  $region13: #{tpu_custom_call.1} parent=0 // pred_fallthru
    _
  // Predicated region
  $region14: #{tpu_custom_call.1} parent=0 // pred_check
    _
  $region15: #{tpu_custom_call.1} parent=0 // pred_check_branch
    %19 = sbr.rel (0) target = $region17
  $region16: #{tpu_custom_call.1} parent=0 // pred_region
    _
  $region17: #{tpu_custom_call.1} parent=0 // pred_fallthru
    _
  // Predicated region
  $region18: #{tpu_custom_call.1} parent=0 // pred_check
    _
  $region19: #{tpu_custom_call.1} parent=0 // pred_check_branch
    %21 = sbr.rel (0) target = $region21
  $region20: #{tpu_custom_call.1} parent=0 // pred_region
    _
  $region21: #{tpu_custom_call.1} parent=0 // pred_fallthru
    _
  // Predicated region
  $region22: #{tpu_custom_call.1} parent=0 // pred_check
    _
  $region23: #{tpu_custom_call.1} parent=0 // pred_check_branch
    %23 = sbr.rel (0) target = $region25
  $region24: #{tpu_custom_call.1} parent=0 // pred_region
    _
  $region25: #{tpu_custom_call.1} parent=0 // pred_fallthru
    _
  // Predicated region
  $region26: #{tpu_custom_call.1} parent=0 // pred_check
    _
  $region27: #{tpu_custom_call.1} parent=0 // pred_check_branch
    %25 = sbr.rel (0) target = $region29
  $region28: #{tpu_custom_call.1} parent=0 // pred_region
    _
  $region29: #{tpu_custom_call.1} parent=0 // pred_fallthru
    _
  %v26 = vld [vmem:[%s0] sm:$0xff]
  %v27 = vld [vmem:[%s1] sm:$0xff]
  %v28 = vld [vmem:[%s1 + $0x8] sm:$0xff]
  %v29 = vld [vmem:[%s2] sm:$0x1]
  %v31 = vlaneseq
  %v32 = vshrl.u32 %v31, 7
  %v33 = vsub.s32 0, %v32
  %v34 = vrot.slane %v29, %v33
  %vm36 = vcmask 130048
  %v38 = vsel %vm36, %v26, 0
  %40 = vmatprep.subr.mxu0 0.0
  %41 = vmatpush1.msra.mxu0 %v27
  %42 = vmatprep.subr.mxu0 0.0
  %43 = vmatpush1.msra.mxu0 %v28
  %44 = vmatprep.subr.mxu0 0.0
  %45 = vmatpush1.msra.mxu0 0.0
  %46 = vmatprep.subr.mxu0 0.0
  %47 = vmatpush1.msra.mxu0 0.0
  %48 = vmatprep.subr.mxu0 0.0
  %49 = vmatpush1.msra.mxu0 0.0
  %50 = vmatprep.subr.mxu0 0.0
  %51 = vmatpush1.msra.mxu0 0.0
  %52 = vmatprep.subr.mxu0 0.0
  %53 = vmatpush1.msra.mxu0 0.0
  %54 = vmatprep.subr.mxu0 0.0
  %55 = vmatpush1.msra.mxu0 0.0
  %56 = vmatprep.subr.mxu0 0.0
  %57 = vmatpush1.msra.mxu0 0.0
  %58 = vmatprep.subr.mxu0 0.0
  %59 = vmatpush1.msra.mxu0 0.0
  %60 = vmatprep.subr.mxu0 0.0
  %61 = vmatpush1.msra.mxu0 0.0
  %62 = vmatprep.subr.mxu0 0.0
  %63 = vmatpush1.msra.mxu0 0.0
  %64 = vmatprep.subr.mxu0 0.0
  %65 = vmatpush1.msra.mxu0 0.0
  %66 = vmatprep.subr.mxu0 0.0
  %67 = vmatpush1.msra.mxu0 0.0
  %68 = vmatprep.subr.mxu0 0.0
  %69 = vmatpush1.msra.mxu0 0.0
  %70 = vmatprep.subr.mxu0 0.0
  %71 = vmatpush1.msra.mxu0 0.0
  %72 = vmatprep.subr.mxu0 0.0
  %73 = vmatpush1.msra.mxu0 0.0
  %74 = vmatprep.subr.mxu0 0.0
  %75 = vmatpush1.msra.mxu0 0.0
  %76 = vmatprep.subr.mxu0 0.0
  %77 = vmatpush1.msra.mxu0 0.0
  %78 = vmatprep.subr.mxu0 0.0
  %79 = vmatpush1.msra.mxu0 0.0
  %80 = vmatprep.subr.mxu0 0.0
  %81 = vmatpush1.msra.mxu0 0.0
  %82 = vmatprep.subr.mxu0 0.0
  %83 = vmatpush1.msra.mxu0 0.0
  %84 = vmatprep.subr.mxu0 0.0
  %85 = vmatpush1.msra.mxu0 0.0
  %86 = vmatprep.subr.mxu0 0.0
  %87 = vmatpush1.msra.mxu0 0.0
  %88 = vmatprep.subr.mxu0 0.0
  %89 = vmatpush1.msra.mxu0 0.0
  %90 = vmatprep.subr.mxu0 0.0
  %91 = vmatpush1.msra.mxu0 0.0
  %92 = vmatprep.subr.mxu0 0.0
  %93 = vmatpush1.msra.mxu0 0.0
  %94 = vmatprep.subr.mxu0 0.0
  %95 = vmatpush1.msra.mxu0 0.0
  %96 = vmatprep.subr.mxu0 0.0
  %97 = vmatpush1.msra.mxu0 0.0
  %98 = vmatprep.subr.mxu0 0.0
  %99 = vmatpush1.msra.mxu0 0.0
  %100 = vmatprep.subr.mxu0 0.0
  %101 = vmatpush1.msra.mxu0 0.0
  %102 = vmatprep.subr.mxu0 0.0
  %103 = vmatpush1.msra.mxu0 0.0
  %104 = vmatprep.mubr.f32.mxu0 0.0
  %105 = vmatmul.mubr.f32.gmra.mrb[0].mxu0 %v38
  %v106 = vpop.f32.mrb[0].mxu0
  %v107 = vadd.f32 %v34, %v106
  %v108 = vpop.f32.mrb[0].mxu0
  %109 = vdwg.mxu0
  %v110 = vmax.f32 %v107, 0.0
  %v111 = vld [vmem:[%s3] sm:$0xff]
  %v112 = vld [vmem:[%s3 + $0x8] sm:$0xff]
  %v113 = vld [vmem:[%s3 + $0x10] sm:$0xff]
  %v114 = vld [vmem:[%s3 + $0x18] sm:$0xff]
  %v115 = vld [vmem:[%s4] sm:$0x1]
  %v117 = vlaneseq
  %v118 = vshrl.u32 %v117, 7
  %v119 = vsub.s32 0, %v118
  %v120 = vrot.slane %v115, %v119
  %vm122 = vcmask 261120
  %v124 = vsel %vm122, %v110, 0
  %126 = vmatprep.subr.mxu0 0.0
  %127 = vmatpush1.msra.mxu0 %v111
  %128 = vmatprep.subr.mxu0 0.0
  %129 = vmatpush1.msra.mxu0 %v112
  %130 = vmatprep.subr.mxu0 0.0
  %131 = vmatpush1.msra.mxu0 %v113
  %132 = vmatprep.subr.mxu0 0.0
  %133 = vmatpush1.msra.mxu0 %v114
  %134 = vmatprep.subr.mxu0 0.0
  %135 = vmatpush1.msra.mxu0 0.0
  %136 = vmatprep.subr.mxu0 0.0
  %137 = vmatpush1.msra.mxu0 0.0
  %138 = vmatprep.subr.mxu0 0.0
  %139 = vmatpush1.msra.mxu0 0.0
  %140 = vmatprep.subr.mxu0 0.0
  %141 = vmatpush1.msra.mxu0 0.0
  %142 = vmatprep.subr.mxu0 0.0
  %143 = vmatpush1.msra.mxu0 0.0
  %144 = vmatprep.subr.mxu0 0.0
  %145 = vmatpush1.msra.mxu0 0.0
  %146 = vmatprep.subr.mxu0 0.0
  %147 = vmatpush1.msra.mxu0 0.0
  %148 = vmatprep.subr.mxu0 0.0
  %149 = vmatpush1.msra.mxu0 0.0
  %150 = vmatprep.subr.mxu0 0.0
  %151 = vmatpush1.msra.mxu0 0.0
  %152 = vmatprep.subr.mxu0 0.0
  %153 = vmatpush1.msra.mxu0 0.0
  %154 = vmatprep.subr.mxu0 0.0
  %155 = vmatpush1.msra.mxu0 0.0
  %156 = vmatprep.subr.mxu0 0.0
  %157 = vmatpush1.msra.mxu0 0.0
  %158 = vmatprep.subr.mxu0 0.0
  %159 = vmatpush1.msra.mxu0 0.0
  %160 = vmatprep.subr.mxu0 0.0
  %161 = vmatpush1.msra.mxu0 0.0
  %162 = vmatprep.subr.mxu0 0.0
  %163 = vmatpush1.msra.mxu0 0.0
  %164 = vmatprep.subr.mxu0 0.0
  %165 = vmatpush1.msra.mxu0 0.0
  %166 = vmatprep.subr.mxu0 0.0
  %167 = vmatpush1.msra.mxu0 0.0
  %168 = vmatprep.subr.mxu0 0.0
  %169 = vmatpush1.msra.mxu0 0.0
  %170 = vmatprep.subr.mxu0 0.0
  %171 = vmatpush1.msra.mxu0 0.0
  %172 = vmatprep.subr.mxu0 0.0
  %173 = vmatpush1.msra.mxu0 0.0
  %174 = vmatprep.subr.mxu0 0.0
  %175 = vmatpush1.msra.mxu0 0.0
  %176 = vmatprep.subr.mxu0 0.0
  %177 = vmatpush1.msra.mxu0 0.0
  %178 = vmatprep.subr.mxu0 0.0
  %179 = vmatpush1.msra.mxu0 0.0
  %180 = vmatprep.subr.mxu0 0.0
  %181 = vmatpush1.msra.mxu0 0.0
  %182 = vmatprep.subr.mxu0 0.0
  %183 = vmatpush1.msra.mxu0 0.0
  %184 = vmatprep.subr.mxu0 0.0
  %185 = vmatpush1.msra.mxu0 0.0
  %186 = vmatprep.subr.mxu0 0.0
  %187 = vmatpush1.msra.mxu0 0.0
  %188 = vmatprep.subr.mxu0 0.0
  %189 = vmatpush1.msra.mxu0 0.0
  %190 = vmatprep.mubr.f32.mxu0 0.0
  %191 = vmatmul.mubr.f32.gmra.mrb[0].mxu0 %v124
  %v192 = vpop.f32.mrb[0].mxu0
  %v193 = vadd.f32 %v120, %v192
  %v194 = vpop.f32.mrb[0].mxu0
  %195 = vdwg.mxu0
  %v196 = vmax.f32 %v193, 0.0
  %v197 = vld [vmem:[%s5] sm:$0xff]
  %v198 = vld [vmem:[%s5 + $0x8] sm:$0xff]
  %v199 = vld [vmem:[%s6] sm:$0x1]
  %v201 = vlaneseq
  %v202 = vshrl.u32 %v201, 7
  %v203 = vsub.s32 0, %v202
  %v204 = vrot.slane %v199, %v203
  %v207 = vsel %vm36, %v196, 0
  %209 = vmatprep.subr.mxu0 0.0
  %210 = vmatpush1.msra.mxu0 %v197
  %211 = vmatprep.subr.mxu0 0.0
  %212 = vmatpush1.msra.mxu0 %v198
  %213 = vmatprep.subr.mxu0 0.0
  %214 = vmatpush1.msra.mxu0 0.0
  %215 = vmatprep.subr.mxu0 0.0
  %216 = vmatpush1.msra.mxu0 0.0
  %217 = vmatprep.subr.mxu0 0.0
  %218 = vmatpush1.msra.mxu0 0.0
  %219 = vmatprep.subr.mxu0 0.0
  %220 = vmatpush1.msra.mxu0 0.0
  %221 = vmatprep.subr.mxu0 0.0
  %222 = vmatpush1.msra.mxu0 0.0
  %223 = vmatprep.subr.mxu0 0.0
  %224 = vmatpush1.msra.mxu0 0.0
  %225 = vmatprep.subr.mxu0 0.0
  %226 = vmatpush1.msra.mxu0 0.0
  %227 = vmatprep.subr.mxu0 0.0
  %228 = vmatpush1.msra.mxu0 0.0
  %229 = vmatprep.subr.mxu0 0.0
  %230 = vmatpush1.msra.mxu0 0.0
  %231 = vmatprep.subr.mxu0 0.0
  %232 = vmatpush1.msra.mxu0 0.0
  %233 = vmatprep.subr.mxu0 0.0
  %234 = vmatpush1.msra.mxu0 0.0
  %235 = vmatprep.subr.mxu0 0.0
  %236 = vmatpush1.msra.mxu0 0.0
  %237 = vmatprep.subr.mxu0 0.0
  %238 = vmatpush1.msra.mxu0 0.0
  %239 = vmatprep.subr.mxu0 0.0
  %240 = vmatpush1.msra.mxu0 0.0
  %241 = vmatprep.subr.mxu0 0.0
  %242 = vmatpush1.msra.mxu0 0.0
  %243 = vmatprep.subr.mxu0 0.0
  %244 = vmatpush1.msra.mxu0 0.0
  %245 = vmatprep.subr.mxu0 0.0
  %246 = vmatpush1.msra.mxu0 0.0
  %247 = vmatprep.subr.mxu0 0.0
  %248 = vmatpush1.msra.mxu0 0.0
  %249 = vmatprep.subr.mxu0 0.0
  %250 = vmatpush1.msra.mxu0 0.0
  %251 = vmatprep.subr.mxu0 0.0
  %252 = vmatpush1.msra.mxu0 0.0
  %253 = vmatprep.subr.mxu0 0.0
  %254 = vmatpush1.msra.mxu0 0.0
  %255 = vmatprep.subr.mxu0 0.0
  %256 = vmatpush1.msra.mxu0 0.0
  %257 = vmatprep.subr.mxu0 0.0
  %258 = vmatpush1.msra.mxu0 0.0
  %259 = vmatprep.subr.mxu0 0.0
  %260 = vmatpush1.msra.mxu0 0.0
  %261 = vmatprep.subr.mxu0 0.0
  %262 = vmatpush1.msra.mxu0 0.0
  %263 = vmatprep.subr.mxu0 0.0
  %264 = vmatpush1.msra.mxu0 0.0
  %265 = vmatprep.subr.mxu0 0.0
  %266 = vmatpush1.msra.mxu0 0.0
  %267 = vmatprep.subr.mxu0 0.0
  %268 = vmatpush1.msra.mxu0 0.0
  %269 = vmatprep.subr.mxu0 0.0
  %270 = vmatpush1.msra.mxu0 0.0
  %271 = vmatprep.subr.mxu0 0.0
  %272 = vmatpush1.msra.mxu0 0.0
  %273 = vmatprep.mubr.f32.mxu0 0.0
  %274 = vmatmul.mubr.f32.gmra.mrb[0].mxu0 %v207
  %v275 = vpop.f32.mrb[0].mxu0
  %v276 = vadd.f32 %v204, %v275
  %v277 = vpop.f32.mrb[0].mxu0
  %278 = vdwg.mxu0
  %vm279 = vcmask 15360
  %280 = vst.msk [vmem:[%s7] sm:$0xff] %vm279, %v276
  // Predicated region
  $region30: #{tpu_custom_call.1} parent=0 // pred_check
    _
  $region31: #{tpu_custom_call.1} parent=0 // pred_check_branch
    %282 = sbr.rel (0) target = $region33
  $region32: #{tpu_custom_call.1} parent=0 // pred_region
    _
  $region33: #{tpu_custom_call.1} parent=0 // pred_fallthru
    _
  // Predicated region
  $region34: #{tpu_custom_call.1} parent=0 // pred_check
    _
  $region35: #{tpu_custom_call.1} parent=0 // pred_check_branch
    %284 = sbr.rel (0) target = $region37
  $region36: #{tpu_custom_call.1} parent=0 // pred_region
    _
  $region37: #{tpu_custom_call.1} parent=0 // pred_fallthru
    _

</llo_original>
